<compile_context>
chip_gen: v6e
topology: v6e:2x2x1
jax: 0.10.0
libtpu: 0.0.40
codegen_flags: <defaults>
</compile_context>

<pallas_src>
import jax
import jax.numpy as jnp
from jax import lax
from jax.experimental import pallas as pl
from jax.experimental.pallas import tpu as pltpu


def _round_up(x, m):
    return (x + m - 1) // m * m


def _vmem_capacity_bytes():
    try:
        info = pltpu.get_tpu_info()
        cap = getattr(info, "vmem_capacity_bytes", None)
        if cap:
            return int(cap)
    except Exception:
        pass
    return 64 * 1024 * 1024  # conservative (v7x per-TensorCore) fallback


def _make_kernel(hidden_real, unroll):
    def kernel(x_ref, wcat_ref, bcat_ref, wa_ref, gamma_ref, beta_ref,
               out_ref, proj_scr, h_scr):
        ts, bt, din = x_ref.shape
        hp = wa_ref.shape[0]

        # Reset the cross-chunk hidden-state carry at the start of every batch
        # tile (sequence is the innermost / "arbitrary" grid axis).
        @pl.when(pl.program_id(1) == 0)
        def _():
            h_scr[...] = jnp.zeros_like(h_scr)

        # Fused input + residual projection: one MXU matmul with N = 2*Hp,
        # written once into a single scratch (the Bx / residual halves are
        # consumed later as lane-aligned ref slices).
        x2d = x_ref[...].astype(jnp.float32).reshape(ts * bt, din)
        proj = jnp.dot(x2d, wcat_ref[...], preferred_element_type=jnp.float32)
        proj_scr[...] = (proj + bcat_ref[...]).reshape(ts, bt, 2 * hp)

        wa = wa_ref[...]

        # Serial recurrence: h_t = Bx_t + h_{t-1} @ W_A.  The loop body is
        # matmul + add only; h_t overwrites the Bx_t slot in place so the
        # LayerNorm / store epilogue stays off the serial critical path.
        def step(t, h_prev):
            h_new = proj_scr[t, :, :hp] + jnp.dot(
                h_prev, wa, preferred_element_type=jnp.float32)
            proj_scr[t, :, :hp] = h_new
            return h_new

        h_scr[...] = lax.fori_loop(0, ts, step, h_scr[...], unroll=unroll)

        # Bulk epilogue over the whole chunk: residual add + LayerNorm + one
        # lane-dense store (hp is a multiple of 128).
        y = proj_scr[:, :, :hp] + proj_scr[:, :, hp:]
        inv_h = 1.0 / float(hidden_real)
        mean = jnp.sum(y, axis=-1, keepdims=True) * inv_h
        cen = y - mean
        if hidden_real != hp:
            # Padded lanes of y are exactly zero (weights/biases zero-padded);
            # mask them out of the variance and the normalized output.
            lane = lax.broadcasted_iota(jnp.int32, y.shape, 2)
            cen = jnp.where(lane < hidden_real, cen, 0.0)
        var = jnp.sum(cen * cen, axis=-1, keepdims=True) * inv_h
        yn = cen * lax.rsqrt(var + 1e-5)
        out_ref[...] = (yn * gamma_ref[...] + beta_ref[...]).astype(out_ref.dtype)

    return kernel


def linear_rnn_block(x, params, *, batch_tile=None, seq_tile=None):
    # Note: when input_size == hidden_size the PyTorch module uses nn.Identity
    # for residual_proj; reproduce that case by passing wres=I, bres=0.
    B, S, Din = x.shape
    H = params["wb"].shape[1]
    Hp = _round_up(H, 128)          # lane-dense hidden size
    pad_h = Hp - H

    def pad_last(a):
        if pad_h == 0:
            return a
        return jnp.pad(a, [(0, 0)] * (a.ndim - 1) + [(0, pad_h)])

    # Fuse the two input-side projections into one (Din, 2*Hp) weight / bias.
    wcat = jnp.concatenate([pad_last(params["wb"]),
                            pad_last(params["wres"])], axis=1)
    bcat = jnp.concatenate([pad_last(params["bb"]),
                            pad_last(params["bres"])], axis=1)
    wa = params["wa"]
    if pad_h:
        wa = jnp.pad(wa, ((0, pad_h), (0, pad_h)))
    gamma = pad_last(params["gamma"])
    beta = pad_last(params["beta"])

    # ---------------- tile selection ----------------
    if batch_tile is None:
        # Largest MXU-friendly batch tile (target 128 rows per serial matmul)
        # whose (bt, Hp) f32 loop carry stays within ~32 vregs (128 KiB) so the
        # fori_loop carry never spills.
        carry_budget = 128 * 1024
        bt_cap = max(8, min(128, (carry_budget // (4 * Hp)) // 8 * 8))
        batch_tile = B if B <= bt_cap else bt_cap
        # TODO(synk): on v7x prefer batch_tile <= B // 2 (when B allows) so the
        # "parallel" batch axis shards across both TensorCores.
    if seq_tile is None:
        # Keep the (ts, bt, 2*Hp) proj scratch around <= 8 MiB; small chunks
        # are cheap now that the per-step LN/store epilogue is gone.
        scratch_budget = 8 * 1024 * 1024
        bt_pad = _round_up(batch_tile, 8)
        seq_tile = max(8, scratch_budget // (bt_pad * 2 * Hp * 4))
        seq_tile = int(max(1, min(seq_tile, 32, S)))

    grid_b = pl.cdiv(B, batch_tile)
    grid_s = pl.cdiv(S, seq_tile)
    unroll = int(max(1, min(8, seq_tile)))

    # ---------------- VMEM budget (padded sizes, per-generation cap) -------
    f32 = 4
    bt_pad = _round_up(batch_tile, 8)
    din_lane = _round_up(Din, 128)
    din_sub = _round_up(Din, 8)
    est = (seq_tile * bt_pad * 2 * Hp * f32              # proj scratch
           + bt_pad * Hp * f32                           # h carry
           + 2 * seq_tile * bt_pad * din_lane * f32      # x   (double-buffered)
           + 2 * seq_tile * bt_pad * Hp * f32            # out (double-buffered)
           + 2 * (din_sub * 2 * Hp + 8 * 2 * Hp          # weights (dbl-buffered)
                  + Hp * Hp + 2 * 8 * Hp) * f32)
    vmem_cap = _vmem_capacity_bytes()                    # 128 MiB v5e/v6e, 64 MiB v7x
    vmem_limit = int(min(max(int(est * 1.5), 32 * 1024 * 1024),
                         int(0.85 * vmem_cap)))          # leave compiler headroom

    # Time-major layout: recurrence indexes the leading axis, no in-kernel
    # transposes (the cheap transposes live in XLA).
    x_tm = jnp.transpose(x, (1, 0, 2))

    kernel = _make_kernel(hidden_real=H, unroll=unroll)

    out_tm = pl.pallas_call(
        kernel,
        out_shape=jax.ShapeDtypeStruct((S, B, Hp), x.dtype),
        grid_spec=pltpu.PrefetchScalarGridSpec(
            num_scalar_prefetch=0,
            grid=(grid_b, grid_s),
            in_specs=[
                pl.BlockSpec((seq_tile, batch_tile, Din),
                             lambda b, s: (s, b, 0)),
                # Resident weights (constant index maps).
                # TODO(synk): pl.Buffered(1) here would halve resident-weight
                # VMEM (v7x budget win) once single-buffered specs are needed.
                pl.BlockSpec((Din, 2 * Hp), lambda b, s: (0, 0)),
                pl.BlockSpec((1, 2 * Hp), lambda b, s: (0, 0)),
                pl.BlockSpec((Hp, Hp), lambda b, s: (0, 0)),
                pl.BlockSpec((1, Hp), lambda b, s: (0, 0)),
                pl.BlockSpec((1, Hp), lambda b, s: (0, 0)),
            ],
            out_specs=pl.BlockSpec((seq_tile, batch_tile, Hp),
                                   lambda b, s: (s, b, 0)),
            scratch_shapes=[
                pltpu.VMEM((seq_tile, batch_tile, 2 * Hp), jnp.float32),  # proj
                pltpu.VMEM((batch_tile, Hp), jnp.float32),                # h carry
            ],
        ),
        compiler_params=pltpu.CompilerParams(
            dimension_semantics=("parallel", "arbitrary"),
            vmem_limit_bytes=vmem_limit,
        ),
    )(x_tm, wcat, bcat, wa, gamma, beta)

    out = jnp.transpose(out_tm, (1, 0, 2))
    return out[:, :, :H] if pad_h else out


def reference(x, p):
    """Pure-JAX reference mirroring the PyTorch forward."""
    B, S, _ = x.shape
    H = p["wb"].shape[1]
    bx = x @ p["wb"] + p["bb"]
    h = jnp.zeros((B, H), jnp.float32)
    hs = []
    for t in range(S):
        h = bx[:, t, :] + h @ p["wa"]
        hs.append(h)
    seq = jnp.stack(hs, axis=1)
    res = x @ p["wres"] + p["bres"]
    y = seq + res
    mean = y.mean(-1, keepdims=True)
    var = ((y - mean) ** 2).mean(-1, keepdims=True)
    return (y - mean) / jnp.sqrt(var + 1e-5) * p["gamma"] + p["beta"]


def init_params(key, input_size, hidden_size):
    ks = jax.random.split(key, 4)
    scale_in = 1.0 / jnp.sqrt(input_size)
    scale_h = 1.0 / jnp.sqrt(hidden_size)
    return {
        # nn.Linear(input_size, hidden_size) -> stored as (in, out)
        "wb":   (jax.random.normal(ks[0], (input_size, hidden_size), jnp.float32)
                 * scale_in),
        "bb":   jnp.full((1, hidden_size), 0.01, jnp.float32),
        # nn.Linear(hidden_size, hidden_size, bias=False)
        "wa":   (jax.random.normal(ks[1], (hidden_size, hidden_size), jnp.float32)
                 * scale_h),
        # residual_proj = nn.Linear(input_size, hidden_size)
        "wres": (jax.random.normal(ks[2], (input_size, hidden_size), jnp.float32)
                 * scale_in),
        "bres": (jax.random.normal(ks[3], (1, hidden_size), jnp.float32)
                 * scale_in),
        # nn.LayerNorm(hidden_size)
        "gamma": jnp.ones((1, hidden_size), jnp.float32),
        "beta":  jnp.zeros((1, hidden_size), jnp.float32),
    }


if __name__ == "__main__":
    batch, seq_len, input_size, hidden_size = 2, 8, 4, 32

    key = jax.random.PRNGKey(0)
    kx, kp = jax.random.split(key)
    x = jax.random.normal(kx, (batch, seq_len, input_size), jnp.float32)
    params = init_params(kp, input_size, hidden_size)

    out = linear_rnn_block(x, params)
    out = jax.block_until_ready(out)

    ref = reference(x, params)
    assert out.shape == (batch, seq_len, hidden_size)
    assert jnp.max(jnp.abs(out - ref)) < 1e-4, "mismatch vs pure-JAX reference"

    print("KERNEL_OK")
</pallas_src>

<mosaic_0001>
module attributes {stable_mosaic.version = 11 : i64} {
  func.func @kernel(%arg0: i32, %arg1: i32, %arg2: memref<8x2x4xf32, #tpu.memory_space<vmem>>, %arg3: memref<4x256xf32, #tpu.memory_space<vmem>>, %arg4: memref<1x256xf32, #tpu.memory_space<vmem>>, %arg5: memref<128x128xf32, #tpu.memory_space<vmem>>, %arg6: memref<1x128xf32, #tpu.memory_space<vmem>>, %arg7: memref<1x128xf32, #tpu.memory_space<vmem>>, %arg8: memref<8x2x128xf32, #tpu.memory_space<vmem>>, %arg9: memref<8x2x256xf32, #tpu.memory_space<vmem>>, %arg10: memref<2x128xf32, #tpu.memory_space<vmem>>) attributes {dimension_semantics = [#tpu.dimension_semantics<parallel>, #tpu.dimension_semantics<arbitrary>], iteration_bounds = array<i64: 1, 1>, scalar_prefetch = 0 : i64, scratch_operands = 2 : i64, tpu.core_type = #tpu.core_type<tc>, window_params = [{transform_indices = @transform_0, window_bounds = array<i64: 8, 2, 4>}, {pipeline_mode = #tpu.pipeline_mode<synchronous>, transform_indices = @transform_1, window_bounds = array<i64: 4, 256>}, {pipeline_mode = #tpu.pipeline_mode<synchronous>, transform_indices = @transform_2, window_bounds = array<i64: 1, 256>}, {pipeline_mode = #tpu.pipeline_mode<synchronous>, transform_indices = @transform_3, window_bounds = array<i64: 128, 128>}, {pipeline_mode = #tpu.pipeline_mode<synchronous>, transform_indices = @transform_4, window_bounds = array<i64: 1, 128>}, {pipeline_mode = #tpu.pipeline_mode<synchronous>, transform_indices = @transform_5, window_bounds = array<i64: 1, 128>}, {transform_indices = @transform_6, window_bounds = array<i64: 8, 2, 128>}]} {
    %c0_i32 = arith.constant 0 : i32
    %0 = arith.cmpi eq, %arg1, %c0_i32 : i32
    %1 = arith.extui %0 : i1 to i32
    %c0_i32_0 = arith.constant 0 : i32
    %2 = arith.cmpi ne, %1, %c0_i32_0 : i32
    scf.if %2 {
      %cst_75 = arith.constant 0.000000e+00 : f32
      %120 = vector.broadcast %cst_75 : f32 to vector<2x128xf32>
      %c0_76 = arith.constant 0 : index
      %c0_77 = arith.constant 0 : index
      %121 = vector.load %arg10[%c0_76, %c0_77] : memref<2x128xf32, #tpu.memory_space<vmem>>, vector<2x128xf32>
      tpu.vector_store %arg10[%c0_76, %c0_77], %120 {strides = array<i32>} : memref<2x128xf32, #tpu.memory_space<vmem>>, vector<2x128xf32>,
    } else {
    }
    %c0 = arith.constant 0 : index
    %c0_1 = arith.constant 0 : index
    %c0_2 = arith.constant 0 : index
    %3 = vector.load %arg2[%c0, %c0_1, %c0_2] : memref<8x2x4xf32, #tpu.memory_space<vmem>>, vector<8x2x4xf32>
    %4 = vector.shape_cast %3 : vector<8x2x4xf32> to vector<16x4xf32>
    %c0_3 = arith.constant 0 : index
    %c0_4 = arith.constant 0 : index
    %5 = vector.load %arg3[%c0_3, %c0_4] : memref<4x256xf32, #tpu.memory_space<vmem>>, vector<4x256xf32>
    %cst = arith.constant dense<0.000000e+00> : vector<16x256xf32>
    %6 = tpu.matmul %4, %5, %cst {dimension_numbers = #tpu.dot_dimension_numbers<[1], [0], [0], [1], [0, 0, 1, 1], [], []>} : vector<16x4xf32>, vector<4x256xf32>, vector<16x256xf32> -> vector<16x256xf32>
    %c0_5 = arith.constant 0 : index
    %c0_6 = arith.constant 0 : index
    %7 = vector.load %arg4[%c0_5, %c0_6] : memref<1x256xf32, #tpu.memory_space<vmem>>, vector<1x256xf32>
    %8 = vector.broadcast %7 : vector<1x256xf32> to vector<16x256xf32>
    %9 = arith.addf %6, %8 : vector<16x256xf32>
    %10 = vector.shape_cast %9 : vector<16x256xf32> to vector<8x2x256xf32>
    %c0_7 = arith.constant 0 : index
    %c0_8 = arith.constant 0 : index
    %c0_9 = arith.constant 0 : index
    %11 = vector.load %arg9[%c0_7, %c0_8, %c0_9] : memref<8x2x256xf32, #tpu.memory_space<vmem>>, vector<8x2x256xf32>
    tpu.vector_store %arg9[%c0_7, %c0_8, %c0_9], %10 {strides = array<i32>} : memref<8x2x256xf32, #tpu.memory_space<vmem>>, vector<8x2x256xf32>,
    %c0_10 = arith.constant 0 : index
    %c0_11 = arith.constant 0 : index
    %12 = vector.load %arg5[%c0_10, %c0_11] : memref<128x128xf32, #tpu.memory_space<vmem>>, vector<128x128xf32>
    %c0_12 = arith.constant 0 : index
    %c0_13 = arith.constant 0 : index
    %13 = vector.load %arg10[%c0_12, %c0_13] : memref<2x128xf32, #tpu.memory_space<vmem>>, vector<2x128xf32>
    %c0_i32_14 = arith.constant 0 : i32
    %14 = arith.index_cast %c0_i32_14 : i32 to index
    %c0_15 = arith.constant 0 : index
    %c0_16 = arith.constant 0 : index
    %15 = vector.load %arg9[%14, %c0_15, %c0_16] : memref<8x2x256xf32, #tpu.memory_space<vmem>>, vector<1x2x128xf32>
    %16 = vector.shape_cast %15 : vector<1x2x128xf32> to vector<2x128xf32>
    %cst_17 = arith.constant dense<0.000000e+00> : vector<2x128xf32>
    %17 = tpu.matmul %13, %12, %cst_17 {dimension_numbers = #tpu.dot_dimension_numbers<[1], [0], [0], [1], [0, 0, 1, 1], [], []>} : vector<2x128xf32>, vector<128x128xf32>, vector<2x128xf32> -> vector<2x128xf32>
    %18 = arith.addf %16, %17 : vector<2x128xf32>
    %19 = arith.index_cast %c0_i32_14 : i32 to index
    %c0_18 = arith.constant 0 : index
    %c0_19 = arith.constant 0 : index
    %20 = vector.load %arg9[%19, %c0_18, %c0_19] : memref<8x2x256xf32, #tpu.memory_space<vmem>>, vector<1x2x128xf32>
    %21 = vector.shape_cast %20 : vector<1x2x128xf32> to vector<2x128xf32>
    %22 = vector.shape_cast %18 : vector<2x128xf32> to vector<1x2x128xf32>
    tpu.vector_store %arg9[%19, %c0_18, %c0_19], %22 {strides = array<i32>} : memref<8x2x256xf32, #tpu.memory_space<vmem>>, vector<1x2x128xf32>,
    %c1_i32 = arith.constant 1 : i32
    %23 = arith.index_cast %c1_i32 : i32 to index
    %c0_20 = arith.constant 0 : index
    %c0_21 = arith.constant 0 : index
    %24 = vector.load %arg9[%23, %c0_20, %c0_21] : memref<8x2x256xf32, #tpu.memory_space<vmem>>, vector<1x2x128xf32>
    %25 = vector.shape_cast %24 : vector<1x2x128xf32> to vector<2x128xf32>
    %cst_22 = arith.constant dense<0.000000e+00> : vector<2x128xf32>
    %26 = tpu.matmul %18, %12, %cst_22 {dimension_numbers = #tpu.dot_dimension_numbers<[1], [0], [0], [1], [0, 0, 1, 1], [], []>} : vector<2x128xf32>, vector<128x128xf32>, vector<2x128xf32> -> vector<2x128xf32>
    %27 = arith.addf %25, %26 : vector<2x128xf32>
    %28 = arith.index_cast %c1_i32 : i32 to index
    %c0_23 = arith.constant 0 : index
    %c0_24 = arith.constant 0 : index
    %29 = vector.load %arg9[%28, %c0_23, %c0_24] : memref<8x2x256xf32, #tpu.memory_space<vmem>>, vector<1x2x128xf32>
    %30 = vector.shape_cast %29 : vector<1x2x128xf32> to vector<2x128xf32>
    %31 = vector.shape_cast %27 : vector<2x128xf32> to vector<1x2x128xf32>
    tpu.vector_store %arg9[%28, %c0_23, %c0_24], %31 {strides = array<i32>} : memref<8x2x256xf32, #tpu.memory_space<vmem>>, vector<1x2x128xf32>,
    %c2_i32 = arith.constant 2 : i32
    %32 = arith.index_cast %c2_i32 : i32 to index
    %c0_25 = arith.constant 0 : index
    %c0_26 = arith.constant 0 : index
    %33 = vector.load %arg9[%32, %c0_25, %c0_26] : memref<8x2x256xf32, #tpu.memory_space<vmem>>, vector<1x2x128xf32>
    %34 = vector.shape_cast %33 : vector<1x2x128xf32> to vector<2x128xf32>
    %cst_27 = arith.constant dense<0.000000e+00> : vector<2x128xf32>
    %35 = tpu.matmul %27, %12, %cst_27 {dimension_numbers = #tpu.dot_dimension_numbers<[1], [0], [0], [1], [0, 0, 1, 1], [], []>} : vector<2x128xf32>, vector<128x128xf32>, vector<2x128xf32> -> vector<2x128xf32>
    %36 = arith.addf %34, %35 : vector<2x128xf32>
    %37 = arith.index_cast %c2_i32 : i32 to index
    %c0_28 = arith.constant 0 : index
    %c0_29 = arith.constant 0 : index
    %38 = vector.load %arg9[%37, %c0_28, %c0_29] : memref<8x2x256xf32, #tpu.memory_space<vmem>>, vector<1x2x128xf32>
    %39 = vector.shape_cast %38 : vector<1x2x128xf32> to vector<2x128xf32>
    %40 = vector.shape_cast %36 : vector<2x128xf32> to vector<1x2x128xf32>
    tpu.vector_store %arg9[%37, %c0_28, %c0_29], %40 {strides = array<i32>} : memref<8x2x256xf32, #tpu.memory_space<vmem>>, vector<1x2x128xf32>,
    %c3_i32 = arith.constant 3 : i32
    %41 = arith.index_cast %c3_i32 : i32 to index
    %c0_30 = arith.constant 0 : index
    %c0_31 = arith.constant 0 : index
    %42 = vector.load %arg9[%41, %c0_30, %c0_31] : memref<8x2x256xf32, #tpu.memory_space<vmem>>, vector<1x2x128xf32>
    %43 = vector.shape_cast %42 : vector<1x2x128xf32> to vector<2x128xf32>
    %cst_32 = arith.constant dense<0.000000e+00> : vector<2x128xf32>
    %44 = tpu.matmul %36, %12, %cst_32 {dimension_numbers = #tpu.dot_dimension_numbers<[1], [0], [0], [1], [0, 0, 1, 1], [], []>} : vector<2x128xf32>, vector<128x128xf32>, vector<2x128xf32> -> vector<2x128xf32>
    %45 = arith.addf %43, %44 : vector<2x128xf32>
    %46 = arith.index_cast %c3_i32 : i32 to index
    %c0_33 = arith.constant 0 : index
    %c0_34 = arith.constant 0 : index
    %47 = vector.load %arg9[%46, %c0_33, %c0_34] : memref<8x2x256xf32, #tpu.memory_space<vmem>>, vector<1x2x128xf32>
    %48 = vector.shape_cast %47 : vector<1x2x128xf32> to vector<2x128xf32>
    %49 = vector.shape_cast %45 : vector<2x128xf32> to vector<1x2x128xf32>
    tpu.vector_store %arg9[%46, %c0_33, %c0_34], %49 {strides = array<i32>} : memref<8x2x256xf32, #tpu.memory_space<vmem>>, vector<1x2x128xf32>,
    %c4_i32 = arith.constant 4 : i32
    %50 = arith.index_cast %c4_i32 : i32 to index
    %c0_35 = arith.constant 0 : index
    %c0_36 = arith.constant 0 : index
    %51 = vector.load %arg9[%50, %c0_35, %c0_36] : memref<8x2x256xf32, #tpu.memory_space<vmem>>, vector<1x2x128xf32>
    %52 = vector.shape_cast %51 : vector<1x2x128xf32> to vector<2x128xf32>
    %cst_37 = arith.constant dense<0.000000e+00> : vector<2x128xf32>
    %53 = tpu.matmul %45, %12, %cst_37 {dimension_numbers = #tpu.dot_dimension_numbers<[1], [0], [0], [1], [0, 0, 1, 1], [], []>} : vector<2x128xf32>, vector<128x128xf32>, vector<2x128xf32> -> vector<2x128xf32>
    %54 = arith.addf %52, %53 : vector<2x128xf32>
    %55 = arith.index_cast %c4_i32 : i32 to index
    %c0_38 = arith.constant 0 : index
    %c0_39 = arith.constant 0 : index
    %56 = vector.load %arg9[%55, %c0_38, %c0_39] : memref<8x2x256xf32, #tpu.memory_space<vmem>>, vector<1x2x128xf32>
    %57 = vector.shape_cast %56 : vector<1x2x128xf32> to vector<2x128xf32>
    %58 = vector.shape_cast %54 : vector<2x128xf32> to vector<1x2x128xf32>
    tpu.vector_store %arg9[%55, %c0_38, %c0_39], %58 {strides = array<i32>} : memref<8x2x256xf32, #tpu.memory_space<vmem>>, vector<1x2x128xf32>,
    %c5_i32 = arith.constant 5 : i32
    %59 = arith.index_cast %c5_i32 : i32 to index
    %c0_40 = arith.constant 0 : index
    %c0_41 = arith.constant 0 : index
    %60 = vector.load %arg9[%59, %c0_40, %c0_41] : memref<8x2x256xf32, #tpu.memory_space<vmem>>, vector<1x2x128xf32>
    %61 = vector.shape_cast %60 : vector<1x2x128xf32> to vector<2x128xf32>
    %cst_42 = arith.constant dense<0.000000e+00> : vector<2x128xf32>
    %62 = tpu.matmul %54, %12, %cst_42 {dimension_numbers = #tpu.dot_dimension_numbers<[1], [0], [0], [1], [0, 0, 1, 1], [], []>} : vector<2x128xf32>, vector<128x128xf32>, vector<2x128xf32> -> vector<2x128xf32>
    %63 = arith.addf %61, %62 : vector<2x128xf32>
    %64 = arith.index_cast %c5_i32 : i32 to index
    %c0_43 = arith.constant 0 : index
    %c0_44 = arith.constant 0 : index
    %65 = vector.load %arg9[%64, %c0_43, %c0_44] : memref<8x2x256xf32, #tpu.memory_space<vmem>>, vector<1x2x128xf32>
    %66 = vector.shape_cast %65 : vector<1x2x128xf32> to vector<2x128xf32>
    %67 = vector.shape_cast %63 : vector<2x128xf32> to vector<1x2x128xf32>
    tpu.vector_store %arg9[%64, %c0_43, %c0_44], %67 {strides = array<i32>} : memref<8x2x256xf32, #tpu.memory_space<vmem>>, vector<1x2x128xf32>,
    %c6_i32 = arith.constant 6 : i32
    %68 = arith.index_cast %c6_i32 : i32 to index
    %c0_45 = arith.constant 0 : index
    %c0_46 = arith.constant 0 : index
    %69 = vector.load %arg9[%68, %c0_45, %c0_46] : memref<8x2x256xf32, #tpu.memory_space<vmem>>, vector<1x2x128xf32>
    %70 = vector.shape_cast %69 : vector<1x2x128xf32> to vector<2x128xf32>
    %cst_47 = arith.constant dense<0.000000e+00> : vector<2x128xf32>
    %71 = tpu.matmul %63, %12, %cst_47 {dimension_numbers = #tpu.dot_dimension_numbers<[1], [0], [0], [1], [0, 0, 1, 1], [], []>} : vector<2x128xf32>, vector<128x128xf32>, vector<2x128xf32> -> vector<2x128xf32>
    %72 = arith.addf %70, %71 : vector<2x128xf32>
    %73 = arith.index_cast %c6_i32 : i32 to index
    %c0_48 = arith.constant 0 : index
    %c0_49 = arith.constant 0 : index
    %74 = vector.load %arg9[%73, %c0_48, %c0_49] : memref<8x2x256xf32, #tpu.memory_space<vmem>>, vector<1x2x128xf32>
    %75 = vector.shape_cast %74 : vector<1x2x128xf32> to vector<2x128xf32>
    %76 = vector.shape_cast %72 : vector<2x128xf32> to vector<1x2x128xf32>
    tpu.vector_store %arg9[%73, %c0_48, %c0_49], %76 {strides = array<i32>} : memref<8x2x256xf32, #tpu.memory_space<vmem>>, vector<1x2x128xf32>,
    %c7_i32 = arith.constant 7 : i32
    %77 = arith.index_cast %c7_i32 : i32 to index
    %c0_50 = arith.constant 0 : index
    %c0_51 = arith.constant 0 : index
    %78 = vector.load %arg9[%77, %c0_50, %c0_51] : memref<8x2x256xf32, #tpu.memory_space<vmem>>, vector<1x2x128xf32>
    %79 = vector.shape_cast %78 : vector<1x2x128xf32> to vector<2x128xf32>
    %cst_52 = arith.constant dense<0.000000e+00> : vector<2x128xf32>
    %80 = tpu.matmul %72, %12, %cst_52 {dimension_numbers = #tpu.dot_dimension_numbers<[1], [0], [0], [1], [0, 0, 1, 1], [], []>} : vector<2x128xf32>, vector<128x128xf32>, vector<2x128xf32> -> vector<2x128xf32>
    %81 = arith.addf %79, %80 : vector<2x128xf32>
    %82 = arith.index_cast %c7_i32 : i32 to index
    %c0_53 = arith.constant 0 : index
    %c0_54 = arith.constant 0 : index
    %83 = vector.load %arg9[%82, %c0_53, %c0_54] : memref<8x2x256xf32, #tpu.memory_space<vmem>>, vector<1x2x128xf32>
    %84 = vector.shape_cast %83 : vector<1x2x128xf32> to vector<2x128xf32>
    %85 = vector.shape_cast %81 : vector<2x128xf32> to vector<1x2x128xf32>
    tpu.vector_store %arg9[%82, %c0_53, %c0_54], %85 {strides = array<i32>} : memref<8x2x256xf32, #tpu.memory_space<vmem>>, vector<1x2x128xf32>,
    %c8_i32 = arith.constant 8 : i32
    %c0_55 = arith.constant 0 : index
    %c0_56 = arith.constant 0 : index
    %86 = vector.load %arg10[%c0_55, %c0_56] : memref<2x128xf32, #tpu.memory_space<vmem>>, vector<2x128xf32>
    tpu.vector_store %arg10[%c0_55, %c0_56], %81 {strides = array<i32>} : memref<2x128xf32, #tpu.memory_space<vmem>>, vector<2x128xf32>,
    %c0_57 = arith.constant 0 : index
    %c0_58 = arith.constant 0 : index
    %c0_59 = arith.constant 0 : index
    %87 = vector.load %arg9[%c0_57, %c0_58, %c0_59] : memref<8x2x256xf32, #tpu.memory_space<vmem>>, vector<8x2x128xf32>
    %c0_60 = arith.constant 0 : index
    %c0_61 = arith.constant 0 : index
    %c128 = arith.constant 128 : index
    %88 = vector.load %arg9[%c0_60, %c0_61, %c128] : memref<8x2x256xf32, #tpu.memory_space<vmem>>, vector<8x2x128xf32>
    %89 = arith.addf %87, %88 : vector<8x2x128xf32>
    %cst_62 = arith.constant dense<0.000000e+00> : vector<8x2xf32>
    %90 = vector.multi_reduction <add>, %89, %cst_62 [2] : vector<8x2x128xf32> to vector<8x2xf32>
    %91 = vector.shape_cast %90 : vector<8x2xf32> to vector<8x2x1xf32>
    %cst_63 = arith.constant 3.125000e-02 : f32
    %92 = vector.broadcast %cst_63 : f32 to vector<8x2x1xf32>
    %93 = arith.mulf %91, %92 : vector<8x2x1xf32>
    %94 = vector.broadcast %93 : vector<8x2x1xf32> to vector<8x2x128xf32>
    %95 = arith.subf %89, %94 : vector<8x2x128xf32>
    %96 = tpu.iota {dimensions = array<i32: 2>} : vector<8x2x128xi32>
    %c32_i32 = arith.constant 32 : i32
    %97 = vector.broadcast %c32_i32 : i32 to vector<8x2x128xi32>
    %98 = arith.cmpi slt, %96, %97 : vector<8x2x128xi32>
    %cst_64 = arith.constant 0.000000e+00 : f32
    %99 = vector.broadcast %cst_64 : f32 to vector<8x2x128xf32>
    %100 = arith.select %98, %95, %99 : vector<8x2x128xi1>, vector<8x2x128xf32>
    %101 = arith.mulf %100, %100 : vector<8x2x128xf32>
    %cst_65 = arith.constant dense<0.000000e+00> : vector<8x2xf32>
    %102 = vector.multi_reduction <add>, %101, %cst_65 [2] : vector<8x2x128xf32> to vector<8x2xf32>
    %103 = vector.shape_cast %102 : vector<8x2xf32> to vector<8x2x1xf32>
    %cst_66 = arith.constant 3.125000e-02 : f32
    %104 = vector.broadcast %cst_66 : f32 to vector<8x2x1xf32>
    %105 = arith.mulf %103, %104 : vector<8x2x1xf32>
    %cst_67 = arith.constant 9.99999974E-6 : f32
    %106 = vector.broadcast %cst_67 : f32 to vector<8x2x1xf32>
    %107 = arith.addf %105, %106 : vector<8x2x1xf32>
    %108 = math.rsqrt %107 : vector<8x2x1xf32>
    %109 = vector.broadcast %108 : vector<8x2x1xf32> to vector<8x2x128xf32>
    %110 = arith.mulf %100, %109 : vector<8x2x128xf32>
    %c0_68 = arith.constant 0 : index
    %c0_69 = arith.constant 0 : index
    %111 = vector.load %arg6[%c0_68, %c0_69] : memref<1x128xf32, #tpu.memory_space<vmem>>, vector<1x128xf32>
    %112 = vector.shape_cast %111 : vector<1x128xf32> to vector<1x1x128xf32>
    %113 = vector.broadcast %112 : vector<1x1x128xf32> to vector<8x2x128xf32>
    %114 = arith.mulf %110, %113 : vector<8x2x128xf32>
    %c0_70 = arith.constant 0 : index
    %c0_71 = arith.constant 0 : index
    %115 = vector.load %arg7[%c0_70, %c0_71] : memref<1x128xf32, #tpu.memory_space<vmem>>, vector<1x128xf32>
    %116 = vector.shape_cast %115 : vector<1x128xf32> to vector<1x1x128xf32>
    %117 = vector.broadcast %116 : vector<1x1x128xf32> to vector<8x2x128xf32>
    %118 = arith.addf %114, %117 : vector<8x2x128xf32>
    %c0_72 = arith.constant 0 : index
    %c0_73 = arith.constant 0 : index
    %c0_74 = arith.constant 0 : index
    %119 = vector.load %arg8[%c0_72, %c0_73, %c0_74] : memref<8x2x128xf32, #tpu.memory_space<vmem>>, vector<8x2x128xf32>
    tpu.vector_store %arg8[%c0_72, %c0_73, %c0_74], %118 {strides = array<i32>} : memref<8x2x128xf32, #tpu.memory_space<vmem>>, vector<8x2x128xf32>,
    return
  }
  func.func @transform_0(%arg0: i32, %arg1: i32) -> (i32, i32, i32) {
    %c0_i32 = arith.constant 0 : i32
    %c0_i32_0 = arith.constant 0 : i32
    return %arg1, %arg0, %c0_i32 : i32, i32, i32
  }
  func.func @transform_1(%arg0: i32, %arg1: i32) -> (i32, i32) {
    %c0_i32 = arith.constant 0 : i32
    %c0_i32_0 = arith.constant 0 : i32
    %c0_i32_1 = arith.constant 0 : i32
    return %c0_i32, %c0_i32_0 : i32, i32
  }
  func.func @transform_2(%arg0: i32, %arg1: i32) -> (i32, i32) {
    %c0_i32 = arith.constant 0 : i32
    %c0_i32_0 = arith.constant 0 : i32
    %c0_i32_1 = arith.constant 0 : i32
    return %c0_i32, %c0_i32_0 : i32, i32
  }
  func.func @transform_3(%arg0: i32, %arg1: i32) -> (i32, i32) {
    %c0_i32 = arith.constant 0 : i32
    %c0_i32_0 = arith.constant 0 : i32
    %c0_i32_1 = arith.constant 0 : i32
    return %c0_i32, %c0_i32_0 : i32, i32
  }
  func.func @transform_4(%arg0: i32, %arg1: i32) -> (i32, i32) {
    %c0_i32 = arith.constant 0 : i32
    %c0_i32_0 = arith.constant 0 : i32
    %c0_i32_1 = arith.constant 0 : i32
    return %c0_i32, %c0_i32_0 : i32, i32
  }
  func.func @transform_5(%arg0: i32, %arg1: i32) -> (i32, i32) {
    %c0_i32 = arith.constant 0 : i32
    %c0_i32_0 = arith.constant 0 : i32
    %c0_i32_1 = arith.constant 0 : i32
    return %c0_i32, %c0_i32_0 : i32, i32
  }
  func.func @transform_6(%arg0: i32, %arg1: i32) -> (i32, i32, i32) {
    %c0_i32 = arith.constant 0 : i32
    %c0_i32_0 = arith.constant 0 : i32
    return %arg1, %arg0, %c0_i32 : i32, i32, i32
  }
}

</mosaic_0001>

<llo_original>
// kernel: tpu_custom_call.1
$region0: #{tpu_custom_call.1}
  #allocation0 [shape = 'u32[]', space=smem, size = 0x4, offset = 0x4, fixed_abs, tag = 'smem constant byte address 0x4 - core index']
  #allocation1 [shape = 'u32[144,128]{1,0:T(1,128)}', space=vmem, size = 0x12000, scoped, tag = 'internal scratch']
  #allocation2 [shape = 'f32[8,2,256]{2,1,0:T(2,128)}', space=vmem, size = 0x4000, scoped, tag = 'scratch operand']
  #allocation3 [shape = 'f32[2,128]{1,0:T(2,128)}', space=vmem, size = 0x400, scoped, tag = 'scratch operand']
  %s0 = inlined_call_operand.vmem [shape: f32[8,2,4], index: 0, kind: input, shape index: {}]
  %s1 = inlined_call_operand.vmem [shape: f32[4,256], index: 1, kind: input, shape index: {}]
  %s2 = inlined_call_operand.vmem [shape: f32[1,256], index: 2, kind: input, shape index: {}]
  %s3 = inlined_call_operand.hbm [shape: f32[128,128], index: 3, kind: input, shape index: {}]
  %s4 = inlined_call_operand.vmem [shape: f32[1,128], index: 4, kind: input, shape index: {}]
  %s5 = inlined_call_operand.vmem [shape: f32[1,128], index: 5, kind: input, shape index: {}]
  %s6 = inlined_call_operand.hbm [shape: f32[8,2,128], index: 6, kind: output, shape index: {}]
  %s7 = sld [smem:[#allocation0]]
  $region42: #{tpu_custom_call.1} parent=0
    _
  %s9 = ssub.s32 1, %s7
  %s10 = scalar_select 0, %s9, %s7
  $region1: #{tpu_custom_call.1} parent=0
    #allocation4 [shape = 'u8[65536]{0}', space=vmem, size = 0x10000, scoped, tag = 'input window, operand 3, single buffered']
    #allocation5 [shape = 's32[1]{0}', space=sflag, size = 0x4, scoped, tag = 'scoped memory for tpu_custom_call.1']
    #allocation6 [shape = 's32[1]{0}', space=sflag, size = 0x4, scoped, tag = 'scoped memory for tpu_custom_call.1']
    #allocation7 [shape = 'u8[8192]{0}', space=vmem, size = 0x2000, scoped, tag = 'output window, operand 0, single buffered']
    %11 = vsyncpa [#allocation5], 0
    %12 = vsyncpa [#allocation6], 0
    // Predicated region
    $region2: #{tpu_custom_call.1} parent=1 // pred_check
      _
    $region3: #{tpu_custom_call.1} parent=1 // pred_check_branch
      %14 = sbr.rel (0) target = $region5
    $region4: #{tpu_custom_call.1} parent=1 // pred_region
      _
    $region5: #{tpu_custom_call.1} parent=1 // pred_fallthru
      _
    // Predicated region
    $region6: #{tpu_custom_call.1} parent=1 // pred_check
      _
    $region7: #{tpu_custom_call.1} parent=1 // pred_check_branch
      %16 = sbr.rel (0) target = $region9
    $region8: #{tpu_custom_call.1} parent=1 // pred_region
      _
    $region9: #{tpu_custom_call.1} parent=1 // pred_fallthru
      _
    // Predicated region
    $region10: #{tpu_custom_call.1} parent=1 // pred_check
      _
    $region11: #{tpu_custom_call.1} parent=1 // pred_check_branch
      %18 = sbr.rel (0) target = $region13
    $region12: #{tpu_custom_call.1} parent=1 // pred_region
      _
    $region13: #{tpu_custom_call.1} parent=1 // pred_fallthru
      _
    // Predicated region
    $region14: #{tpu_custom_call.1} parent=1 // pred_check
      _
    $region15: #{tpu_custom_call.1} parent=1 // pred_check_branch
      %20 = sbr.rel (0) target = $region17
    $region16: #{tpu_custom_call.1} parent=1 // pred_region
      %s22 = ssub.s32 2048, 2048
      %23 = vsyncadd [#allocation5], %s22
      %s24 = sshll.u32 [#allocation4], 4
      %s25 = int_to_ptr.vmem [resolvable:$true] %s24
      %30 = dma.hbm_to_vmem [thread:$0]  %s3, 2048, %s25, [#allocation5], 128, 128, 8
    $region17: #{tpu_custom_call.1} parent=1 // pred_fallthru
      _
    // Predicated region
    $region18: #{tpu_custom_call.1} parent=1 // pred_check
      _
    $region19: #{tpu_custom_call.1} parent=1 // pred_check_branch
      %32 = sbr.rel (0) target = $region21
    $region20: #{tpu_custom_call.1} parent=1 // pred_region
      _
    $region21: #{tpu_custom_call.1} parent=1 // pred_fallthru
      _
    // Predicated region
    $region22: #{tpu_custom_call.1} parent=1 // pred_check
      _
    $region23: #{tpu_custom_call.1} parent=1 // pred_check_branch
      %34 = sbr.rel (0) target = $region25
    $region24: #{tpu_custom_call.1} parent=1 // pred_region
      _
    $region25: #{tpu_custom_call.1} parent=1 // pred_fallthru
      _
    // Predicated region
    $region26: #{tpu_custom_call.1} parent=1 // pred_check
      _
    $region27: #{tpu_custom_call.1} parent=1 // pred_check_branch
      %36 = sbr.rel (0) target = $region29
    $region28: #{tpu_custom_call.1} parent=1 // pred_region
      %37 = dma.done [#allocation5], 2048
    $region29: #{tpu_custom_call.1} parent=1 // pred_fallthru
      _
    %p38 = scmp.eq.s32.totalorder 0, 0
    // Predicated region
    $region30: #{tpu_custom_call.1} parent=1 // pred_check
      %p39 = pneg %p38
    $region31: #{tpu_custom_call.1} parent=1 // pred_check_branch
      %41 = sbr.rel (%p39) target = $region33
    $region32: #{tpu_custom_call.1} parent=1 // pred_region
      %42 = vst [vmem:[#allocation3] sm:$0x3] 0.0
    $region33: #{tpu_custom_call.1} parent=1 // pred_fallthru
      _
    %v43 = vld [vmem:[%s0] sm:$0x3]
    %v44 = vld [vmem:[%s0 + $0x2] sm:$0x3]
    %v45 = vld [vmem:[%s0 + $0x4] sm:$0x3]
    %v46 = vld [vmem:[%s0 + $0x6] sm:$0x3]
    %v47 = vld [vmem:[%s0 + $0x8] sm:$0x3]
    %v48 = vld [vmem:[%s0 + $0xa] sm:$0x3]
    %v49 = vld [vmem:[%s0 + $0xc] sm:$0x3]
    %v50 = vld [vmem:[%s0 + $0xe] sm:$0x3]
    %v51 = vld [vmem:[%s1] sm:$0xff]
    %v52 = vld [vmem:[%s2] sm:$0x3]
    %v54 = vlaneseq
    %v55 = vshrl.u32 %v54, 7
    %v56 = vsub.s32 0, %v55
    %v57 = vrot.slane %v52, %v56
    %v58 = vlaneseq
    %v59 = vshrl.u32 %v58, 7
    %v60 = vsub.s32 1, %v59
    %v61 = vrot.slane %v52, %v60
    %v72 = vcombine.low %v43, %v44
    %v73 = vcombine.low %v45, %v46
    %v75 = vunpack.c.l.s4 1983009808
    %v76 = vunpack.c.0.s8 %v75
    %v77 = vlaneseq
    %v78 = vshrl.u32 %v77, 7
    %v79 = vsub.s32 %v76, %v78
    %v80 = vrot.slane %v72, %v79
    %v82 = vunpack.c.l.s4 1983009808
    %v83 = vunpack.c.0.s8 %v82
    %v84 = vlaneseq
    %v85 = vshrl.u32 %v84, 7
    %v86 = vsub.s32 %v83, %v85
    %v87 = vrot.slane %v73, %v86
    %v88 = vcombine.low %v80, %v87
    %v89 = vcombine.low %v47, %v48
    %v90 = vcombine.low %v49, %v50
    %v92 = vunpack.c.l.s4 1983009808
    %v93 = vunpack.c.0.s8 %v92
    %v94 = vlaneseq
    %v95 = vshrl.u32 %v94, 7
    %v96 = vsub.s32 %v93, %v95
    %v97 = vrot.slane %v89, %v96
    %v99 = vunpack.c.l.s4 1983009808
    %v100 = vunpack.c.0.s8 %v99
    %v101 = vlaneseq
    %v102 = vshrl.u32 %v101, 7
    %v103 = vsub.s32 %v100, %v102
    %v104 = vrot.slane %v90, %v103
    %v105 = vcombine.low %v97, %v104
    %v107 = vcombine.high %v51, %v51
    %vm108 = vcmask 31744
    %v109 = vsel %vm108, %v88, 0
    %v111 = vsel %vm108, %v105, 0
    %vm113 = vcmask 1043456
    %v114 = vsel %vm113, %v51, 0
    %v116 = vsel %vm113, %v107, 0
    %118 = vmatprep.subr.mxu0 0.0
    %119 = vmatpush1.msra.mxu0 0.0
    %120 = vmatprep.subr.mxu0 0.0
    %121 = vmatpush1.msra.mxu0 0.0
    %122 = vmatprep.subr.mxu0 0.0
    %123 = vmatpush1.msra.mxu0 0.0
    %124 = vmatprep.subr.mxu0 0.0
    %125 = vmatpush1.msra.mxu0 0.0
    %126 = vmatprep.subr.mxu0 0.0
    %127 = vmatpush1.msra.mxu0 0.0
    %128 = vmatprep.subr.mxu0 0.0
    %129 = vmatpush1.msra.mxu0 0.0
    %130 = vmatprep.subr.mxu0 0.0
    %131 = vmatpush1.msra.mxu0 0.0
    %132 = vmatprep.subr.mxu0 0.0
    %133 = vmatpush1.msra.mxu0 0.0
    %134 = vmatprep.subr.mxu0 0.0
    %135 = vmatpush1.msra.mxu0 0.0
    %136 = vmatprep.subr.mxu0 0.0
    %137 = vmatpush1.msra.mxu0 0.0
    %138 = vmatprep.subr.mxu0 0.0
    %139 = vmatpush1.msra.mxu0 0.0
    %140 = vmatprep.subr.mxu0 0.0
    %141 = vmatpush1.msra.mxu0 0.0
    %142 = vmatprep.subr.mxu0 0.0
    %143 = vmatpush1.msra.mxu0 0.0
    %144 = vmatprep.subr.mxu0 0.0
    %145 = vmatpush1.msra.mxu0 0.0
    %146 = vmatprep.subr.mxu0 0.0
    %147 = vmatpush1.msra.mxu0 0.0
    %148 = vmatprep.subr.mxu0 %v116
    %149 = vmatpush1.msra.mxu0 %v114
    %150 = vmatprep.subr.mxu0 0.0
    %151 = vmatpush2.msra.mxu0 0.0
    %152 = vmatprep.subr.mxu0 0.0
    %153 = vmatpush2.msra.mxu0 0.0
    %154 = vmatprep.subr.mxu0 0.0
    %155 = vmatpush2.msra.mxu0 0.0
    %156 = vmatprep.subr.mxu0 0.0
    %157 = vmatpush2.msra.mxu0 0.0
    %158 = vmatprep.subr.mxu0 0.0
    %159 = vmatpush2.msra.mxu0 0.0
    %160 = vmatprep.subr.mxu0 0.0
    %161 = vmatpush2.msra.mxu0 0.0
    %162 = vmatprep.subr.mxu0 0.0
    %163 = vmatpush2.msra.mxu0 0.0
    %164 = vmatprep.subr.mxu0 0.0
    %165 = vmatpush2.msra.mxu0 0.0
    %166 = vmatprep.subr.mxu0 0.0
    %167 = vmatpush2.msra.mxu0 0.0
    %168 = vmatprep.subr.mxu0 0.0
    %169 = vmatpush2.msra.mxu0 0.0
    %170 = vmatprep.subr.mxu0 0.0
    %171 = vmatpush2.msra.mxu0 0.0
    %172 = vmatprep.subr.mxu0 0.0
    %173 = vmatpush2.msra.mxu0 0.0
    %174 = vmatprep.subr.mxu0 0.0
    %175 = vmatpush2.msra.mxu0 0.0
    %176 = vmatprep.subr.mxu0 0.0
    %177 = vmatpush2.msra.mxu0 0.0
    %178 = vmatprep.subr.mxu0 0.0
    %179 = vmatpush2.msra.mxu0 0.0
    %180 = vmatprep.subr.mxu0 0.0
    %181 = vmatpush2.msra.mxu0 0.0
    %182 = vmatprep.mubr.f32.mxu0 0.0
    %183 = vmatmul.mubr.f32.gmra.mxu0 %v109
    %v184 = vpop.f32.mrf.mxu0
    %v185 = vadd.f32 %v57, %v184
    %v186 = vpop.f32.mrf.mxu0
    %v187 = vadd.f32 %v61, %v186
    %188 = vmatprep.mubr.f32.mxu0 0.0
    %189 = vmatmul.mubr.f32.gmra.mxu0 %v111
    %v190 = vpop.f32.mrf.mxu0
    %v191 = vadd.f32 %v57, %v190
    %v192 = vpop.f32.mrf.mxu0
    %v193 = vadd.f32 %v61, %v192
    %194 = vdwg.mxu0
    %v199 = vcombine.low %v185, %v187
    %v200 = vcombine.high %v185, %v187
    %v202 = vunpack.c.l.s4 1983009808
    %v203 = vunpack.c.0.s8 %v202
    %v204 = vlaneseq
    %v205 = vshrl.u32 %v204, 7
    %v206 = vsub.s32 %v203, %v205
    %v207 = vrot.slane %v199, %v206
    %v209 = vunpack.c.l.s4 1983009808
    %v210 = vunpack.c.0.s8 %v209
    %v211 = vlaneseq
    %v212 = vshrl.u32 %v211, 7
    %v213 = vsub.s32 %v210, %v212
    %v214 = vrot.slane %v200, %v213
    %v215 = vcombine.high %v207, %v207
    %v216 = vcombine.high %v214, %v214
    %v217 = vcombine.low %v191, %v193
    %v218 = vcombine.high %v191, %v193
    %v220 = vunpack.c.l.s4 1983009808
    %v221 = vunpack.c.0.s8 %v220
    %v222 = vlaneseq
    %v223 = vshrl.u32 %v222, 7
    %v224 = vsub.s32 %v221, %v223
    %v225 = vrot.slane %v217, %v224
    %v227 = vunpack.c.l.s4 1983009808
    %v228 = vunpack.c.0.s8 %v227
    %v229 = vlaneseq
    %v230 = vshrl.u32 %v229, 7
    %v231 = vsub.s32 %v228, %v230
    %v232 = vrot.slane %v218, %v231
    %v233 = vcombine.high %v225, %v225
    %v234 = vcombine.high %v232, %v232
    %243 = vst [vmem:[#allocation2] sm:$0xf] %v207
    %244 = vst [vmem:[#allocation2 + $0x4] sm:$0xf] %v215
    %245 = vst [vmem:[#allocation2 + $0x8] sm:$0xf] %v214
    %246 = vst [vmem:[#allocation2 + $0xc] sm:$0xf] %v216
    %247 = vst [vmem:[#allocation2 + $0x10] sm:$0xf] %v225
    %248 = vst [vmem:[#allocation2 + $0x14] sm:$0xf] %v233
    %249 = vst [vmem:[#allocation2 + $0x18] sm:$0xf] %v232
    %250 = vst [vmem:[#allocation2 + $0x1c] sm:$0xf] %v234
    %v251 = vld [vmem:[#allocation4] sm:$0xff]
    %v252 = vld [vmem:[#allocation4 + $0x8] sm:$0xff]
    %v253 = vld [vmem:[#allocation4 + $0x10] sm:$0xff]
    %v254 = vld [vmem:[#allocation4 + $0x18] sm:$0xff]
    %v255 = vld [vmem:[#allocation4 + $0x20] sm:$0xff]
    %v256 = vld [vmem:[#allocation4 + $0x28] sm:$0xff]
    %v257 = vld [vmem:[#allocation4 + $0x30] sm:$0xff]
    %v258 = vld [vmem:[#allocation4 + $0x38] sm:$0xff]
    %v259 = vld [vmem:[#allocation4 + $0x40] sm:$0xff]
    %v260 = vld [vmem:[#allocation4 + $0x48] sm:$0xff]
    %v261 = vld [vmem:[#allocation4 + $0x50] sm:$0xff]
    %v262 = vld [vmem:[#allocation4 + $0x58] sm:$0xff]
    %v263 = vld [vmem:[#allocation4 + $0x60] sm:$0xff]
    %v264 = vld [vmem:[#allocation4 + $0x68] sm:$0xff]
    %v265 = vld [vmem:[#allocation4 + $0x70] sm:$0xff]
    %v266 = vld [vmem:[#allocation4 + $0x78] sm:$0xff]
    %v267 = vld [vmem:[#allocation3] sm:$0x3]
    %v268 = vld [vmem:[#allocation2] sm:$0x3]
    %269 = vmatprep.subr.mxu0 0.0
    %270 = vmatpush1.msra.mxu0 %v266
    %271 = vmatprep.subr.mxu0 0.0
    %272 = vmatpush1.msra.mxu0 %v265
    %273 = vmatprep.subr.mxu0 0.0
    %274 = vmatpush1.msra.mxu0 %v264
    %275 = vmatprep.subr.mxu0 0.0
    %276 = vmatpush1.msra.mxu0 %v263
    %277 = vmatprep.subr.mxu0 0.0
    %278 = vmatpush1.msra.mxu0 %v262
    %279 = vmatprep.subr.mxu0 0.0
    %280 = vmatpush1.msra.mxu0 %v261
    %281 = vmatprep.subr.mxu0 0.0
    %282 = vmatpush1.msra.mxu0 %v260
    %283 = vmatprep.subr.mxu0 0.0
    %284 = vmatpush1.msra.mxu0 %v259
    %285 = vmatprep.subr.mxu0 0.0
    %286 = vmatpush1.msra.mxu0 %v258
    %287 = vmatprep.subr.mxu0 0.0
    %288 = vmatpush1.msra.mxu0 %v257
    %289 = vmatprep.subr.mxu0 0.0
    %290 = vmatpush1.msra.mxu0 %v256
    %291 = vmatprep.subr.mxu0 0.0
    %292 = vmatpush1.msra.mxu0 %v255
    %293 = vmatprep.subr.mxu0 0.0
    %294 = vmatpush1.msra.mxu0 %v254
    %295 = vmatprep.subr.mxu0 0.0
    %296 = vmatpush1.msra.mxu0 %v253
    %297 = vmatprep.subr.mxu0 0.0
    %298 = vmatpush1.msra.mxu0 %v252
    %299 = vmatprep.subr.mxu0 0.0
    %300 = vmatpush1.msra.mxu0 %v251
    %301 = vmatprep.subr.mxu0 0.0
    %302 = vmatpush2.msra.mxu0 0.0
    %303 = vmatprep.subr.mxu0 0.0
    %304 = vmatpush2.msra.mxu0 0.0
    %305 = vmatprep.subr.mxu0 0.0
    %306 = vmatpush2.msra.mxu0 0.0
    %307 = vmatprep.subr.mxu0 0.0
    %308 = vmatpush2.msra.mxu0 0.0
    %309 = vmatprep.subr.mxu0 0.0
    %310 = vmatpush2.msra.mxu0 0.0
    %311 = vmatprep.subr.mxu0 0.0
    %312 = vmatpush2.msra.mxu0 0.0
    %313 = vmatprep.subr.mxu0 0.0
    %314 = vmatpush2.msra.mxu0 0.0
    %315 = vmatprep.subr.mxu0 0.0
    %316 = vmatpush2.msra.mxu0 0.0
    %317 = vmatprep.subr.mxu0 0.0
    %318 = vmatpush2.msra.mxu0 0.0
    %319 = vmatprep.subr.mxu0 0.0
    %320 = vmatpush2.msra.mxu0 0.0
    %321 = vmatprep.subr.mxu0 0.0
    %322 = vmatpush2.msra.mxu0 0.0
    %323 = vmatprep.subr.mxu0 0.0
    %324 = vmatpush2.msra.mxu0 0.0
    %325 = vmatprep.subr.mxu0 0.0
    %326 = vmatpush2.msra.mxu0 0.0
    %327 = vmatprep.subr.mxu0 0.0
    %328 = vmatpush2.msra.mxu0 0.0
    %329 = vmatprep.subr.mxu0 0.0
    %330 = vmatpush2.msra.mxu0 0.0
    %331 = vmatprep.subr.mxu0 0.0
    %332 = vmatpush2.msra.mxu0 0.0
    %333 = vmatprep.mubr.f32.mxu0 0.0
    %334 = vmatmul.mubr.f32.gmra.mxu0 %v267
    %v335 = vpop.f32.mrf.mxu0
    %v336 = vadd.f32 0.0, %v335
    %v337 = vpop.f32.mrf.mxu0
    %338 = vdwg.mxu0
    %v339 = vadd.f32 %v268, %v336
    %340 = vst [vmem:[#allocation2] sm:$0x3] %v339
    %s341 = scalar_lea.vmem [#allocation2], 4
    %v342 = vld [vmem:[%s341] sm:$0x3]
    %343 = vmatprep.subr.mxu0 0.0
    %344 = vmatpush1.msra.mxu0 %v266
    %345 = vmatprep.subr.mxu0 0.0
    %346 = vmatpush1.msra.mxu0 %v265
    %347 = vmatprep.subr.mxu0 0.0
    %348 = vmatpush1.msra.mxu0 %v264
    %349 = vmatprep.subr.mxu0 0.0
    %350 = vmatpush1.msra.mxu0 %v263
    %351 = vmatprep.subr.mxu0 0.0
    %352 = vmatpush1.msra.mxu0 %v262
    %353 = vmatprep.subr.mxu0 0.0
    %354 = vmatpush1.msra.mxu0 %v261
    %355 = vmatprep.subr.mxu0 0.0
    %356 = vmatpush1.msra.mxu0 %v260
    %357 = vmatprep.subr.mxu0 0.0
    %358 = vmatpush1.msra.mxu0 %v259
    %359 = vmatprep.subr.mxu0 0.0
    %360 = vmatpush1.msra.mxu0 %v258
    %361 = vmatprep.subr.mxu0 0.0
    %362 = vmatpush1.msra.mxu0 %v257
    %363 = vmatprep.subr.mxu0 0.0
    %364 = vmatpush1.msra.mxu0 %v256
    %365 = vmatprep.subr.mxu0 0.0
    %366 = vmatpush1.msra.mxu0 %v255
    %367 = vmatprep.subr.mxu0 0.0
    %368 = vmatpush1.msra.mxu0 %v254
    %369 = vmatprep.subr.mxu0 0.0
    %370 = vmatpush1.msra.mxu0 %v253
    %371 = vmatprep.subr.mxu0 0.0
    %372 = vmatpush1.msra.mxu0 %v252
    %373 = vmatprep.subr.mxu0 0.0
    %374 = vmatpush1.msra.mxu0 %v251
    %375 = vmatprep.subr.mxu0 0.0
    %376 = vmatpush2.msra.mxu0 0.0
    %377 = vmatprep.subr.mxu0 0.0
    %378 = vmatpush2.msra.mxu0 0.0
    %379 = vmatprep.subr.mxu0 0.0
    %380 = vmatpush2.msra.mxu0 0.0
    %381 = vmatprep.subr.mxu0 0.0
    %382 = vmatpush2.msra.mxu0 0.0
    %383 = vmatprep.subr.mxu0 0.0
    %384 = vmatpush2.msra.mxu0 0.0
    %385 = vmatprep.subr.mxu0 0.0
    %386 = vmatpush2.msra.mxu0 0.0
    %387 = vmatprep.subr.mxu0 0.0
    %388 = vmatpush2.msra.mxu0 0.0
    %389 = vmatprep.subr.mxu0 0.0
    %390 = vmatpush2.msra.mxu0 0.0
    %391 = vmatprep.subr.mxu0 0.0
    %392 = vmatpush2.msra.mxu0 0.0
    %393 = vmatprep.subr.mxu0 0.0
    %394 = vmatpush2.msra.mxu0 0.0
    %395 = vmatprep.subr.mxu0 0.0
    %396 = vmatpush2.msra.mxu0 0.0
    %397 = vmatprep.subr.mxu0 0.0
    %398 = vmatpush2.msra.mxu0 0.0
    %399 = vmatprep.subr.mxu0 0.0
    %400 = vmatpush2.msra.mxu0 0.0
    %401 = vmatprep.subr.mxu0 0.0
    %402 = vmatpush2.msra.mxu0 0.0
    %403 = vmatprep.subr.mxu0 0.0
    %404 = vmatpush2.msra.mxu0 0.0
    %405 = vmatprep.subr.mxu0 0.0
    %406 = vmatpush2.msra.mxu0 0.0
    %407 = vmatprep.mubr.f32.mxu0 0.0
    %408 = vmatmul.mubr.f32.gmra.mxu0 %v339
    %v409 = vpop.f32.mrf.mxu0
    %v410 = vadd.f32 0.0, %v409
    %v411 = vpop.f32.mrf.mxu0
    %412 = vdwg.mxu0
    %v413 = vadd.f32 %v342, %v410
    %414 = vst [vmem:[%s341] sm:$0x3] %v413
    %s415 = scalar_lea.vmem [#allocation2], 8
    %v416 = vld [vmem:[%s415] sm:$0x3]
    %417 = vmatprep.subr.mxu0 0.0
    %418 = vmatpush1.msra.mxu0 %v266
    %419 = vmatprep.subr.mxu0 0.0
    %420 = vmatpush1.msra.mxu0 %v265
    %421 = vmatprep.subr.mxu0 0.0
    %422 = vmatpush1.msra.mxu0 %v264
    %423 = vmatprep.subr.mxu0 0.0
    %424 = vmatpush1.msra.mxu0 %v263
    %425 = vmatprep.subr.mxu0 0.0
    %426 = vmatpush1.msra.mxu0 %v262
    %427 = vmatprep.subr.mxu0 0.0
    %428 = vmatpush1.msra.mxu0 %v261
    %429 = vmatprep.subr.mxu0 0.0
    %430 = vmatpush1.msra.mxu0 %v260
    %431 = vmatprep.subr.mxu0 0.0
    %432 = vmatpush1.msra.mxu0 %v259
    %433 = vmatprep.subr.mxu0 0.0
    %434 = vmatpush1.msra.mxu0 %v258
    %435 = vmatprep.subr.mxu0 0.0
    %436 = vmatpush1.msra.mxu0 %v257
    %437 = vmatprep.subr.mxu0 0.0
    %438 = vmatpush1.msra.mxu0 %v256
    %439 = vmatprep.subr.mxu0 0.0
    %440 = vmatpush1.msra.mxu0 %v255
    %441 = vmatprep.subr.mxu0 0.0
    %442 = vmatpush1.msra.mxu0 %v254
    %443 = vmatprep.subr.mxu0 0.0
    %444 = vmatpush1.msra.mxu0 %v253
    %445 = vmatprep.subr.mxu0 0.0
    %446 = vmatpush1.msra.mxu0 %v252
    %447 = vmatprep.subr.mxu0 0.0
    %448 = vmatpush1.msra.mxu0 %v251
    %449 = vmatprep.subr.mxu0 0.0
    %450 = vmatpush2.msra.mxu0 0.0
    %451 = vmatprep.subr.mxu0 0.0
    %452 = vmatpush2.msra.mxu0 0.0
    %453 = vmatprep.subr.mxu0 0.0
    %454 = vmatpush2.msra.mxu0 0.0
    %455 = vmatprep.subr.mxu0 0.0
    %456 = vmatpush2.msra.mxu0 0.0
    %457 = vmatprep.subr.mxu0 0.0
    %458 = vmatpush2.msra.mxu0 0.0
    %459 = vmatprep.subr.mxu0 0.0
    %460 = vmatpush2.msra.mxu0 0.0
    %461 = vmatprep.subr.mxu0 0.0
    %462 = vmatpush2.msra.mxu0 0.0
    %463 = vmatprep.subr.mxu0 0.0
    %464 = vmatpush2.msra.mxu0 0.0
    %465 = vmatprep.subr.mxu0 0.0
    %466 = vmatpush2.msra.mxu0 0.0
    %467 = vmatprep.subr.mxu0 0.0
    %468 = vmatpush2.msra.mxu0 0.0
    %469 = vmatprep.subr.mxu0 0.0
    %470 = vmatpush2.msra.mxu0 0.0
    %471 = vmatprep.subr.mxu0 0.0
    %472 = vmatpush2.msra.mxu0 0.0
    %473 = vmatprep.subr.mxu0 0.0
    %474 = vmatpush2.msra.mxu0 0.0
    %475 = vmatprep.subr.mxu0 0.0
    %476 = vmatpush2.msra.mxu0 0.0
    %477 = vmatprep.subr.mxu0 0.0
    %478 = vmatpush2.msra.mxu0 0.0
    %479 = vmatprep.subr.mxu0 0.0
    %480 = vmatpush2.msra.mxu0 0.0
    %481 = vmatprep.mubr.f32.mxu0 0.0
    %482 = vmatmul.mubr.f32.gmra.mxu0 %v413
    %v483 = vpop.f32.mrf.mxu0
    %v484 = vadd.f32 0.0, %v483
    %v485 = vpop.f32.mrf.mxu0
    %486 = vdwg.mxu0
    %v487 = vadd.f32 %v416, %v484
    %488 = vst [vmem:[%s415] sm:$0x3] %v487
    %s489 = scalar_lea.vmem [#allocation2], 12
    %v490 = vld [vmem:[%s489] sm:$0x3]
    %491 = vmatprep.subr.mxu0 0.0
    %492 = vmatpush1.msra.mxu0 %v266
    %493 = vmatprep.subr.mxu0 0.0
    %494 = vmatpush1.msra.mxu0 %v265
    %495 = vmatprep.subr.mxu0 0.0
    %496 = vmatpush1.msra.mxu0 %v264
    %497 = vmatprep.subr.mxu0 0.0
    %498 = vmatpush1.msra.mxu0 %v263
    %499 = vmatprep.subr.mxu0 0.0
    %500 = vmatpush1.msra.mxu0 %v262
    %501 = vmatprep.subr.mxu0 0.0
    %502 = vmatpush1.msra.mxu0 %v261
    %503 = vmatprep.subr.mxu0 0.0
    %504 = vmatpush1.msra.mxu0 %v260
    %505 = vmatprep.subr.mxu0 0.0
    %506 = vmatpush1.msra.mxu0 %v259
    %507 = vmatprep.subr.mxu0 0.0
    %508 = vmatpush1.msra.mxu0 %v258
    %509 = vmatprep.subr.mxu0 0.0
    %510 = vmatpush1.msra.mxu0 %v257
    %511 = vmatprep.subr.mxu0 0.0
    %512 = vmatpush1.msra.mxu0 %v256
    %513 = vmatprep.subr.mxu0 0.0
    %514 = vmatpush1.msra.mxu0 %v255
    %515 = vmatprep.subr.mxu0 0.0
    %516 = vmatpush1.msra.mxu0 %v254
    %517 = vmatprep.subr.mxu0 0.0
    %518 = vmatpush1.msra.mxu0 %v253
    %519 = vmatprep.subr.mxu0 0.0
    %520 = vmatpush1.msra.mxu0 %v252
    %521 = vmatprep.subr.mxu0 0.0
    %522 = vmatpush1.msra.mxu0 %v251
    %523 = vmatprep.subr.mxu0 0.0
    %524 = vmatpush2.msra.mxu0 0.0
    %525 = vmatprep.subr.mxu0 0.0
    %526 = vmatpush2.msra.mxu0 0.0
    %527 = vmatprep.subr.mxu0 0.0
    %528 = vmatpush2.msra.mxu0 0.0
    %529 = vmatprep.subr.mxu0 0.0
    %530 = vmatpush2.msra.mxu0 0.0
    %531 = vmatprep.subr.mxu0 0.0
    %532 = vmatpush2.msra.mxu0 0.0
    %533 = vmatprep.subr.mxu0 0.0
    %534 = vmatpush2.msra.mxu0 0.0
    %535 = vmatprep.subr.mxu0 0.0
    %536 = vmatpush2.msra.mxu0 0.0
    %537 = vmatprep.subr.mxu0 0.0
    %538 = vmatpush2.msra.mxu0 0.0
    %539 = vmatprep.subr.mxu0 0.0
    %540 = vmatpush2.msra.mxu0 0.0
    %541 = vmatprep.subr.mxu0 0.0
    %542 = vmatpush2.msra.mxu0 0.0
    %543 = vmatprep.subr.mxu0 0.0
    %544 = vmatpush2.msra.mxu0 0.0
    %545 = vmatprep.subr.mxu0 0.0
    %546 = vmatpush2.msra.mxu0 0.0
    %547 = vmatprep.subr.mxu0 0.0
    %548 = vmatpush2.msra.mxu0 0.0
    %549 = vmatprep.subr.mxu0 0.0
    %550 = vmatpush2.msra.mxu0 0.0
    %551 = vmatprep.subr.mxu0 0.0
    %552 = vmatpush2.msra.mxu0 0.0
    %553 = vmatprep.subr.mxu0 0.0
    %554 = vmatpush2.msra.mxu0 0.0
    %555 = vmatprep.mubr.f32.mxu0 0.0
    %556 = vmatmul.mubr.f32.gmra.mxu0 %v487
    %v557 = vpop.f32.mrf.mxu0
    %v558 = vadd.f32 0.0, %v557
    %v559 = vpop.f32.mrf.mxu0
    %560 = vdwg.mxu0
    %v561 = vadd.f32 %v490, %v558
    %562 = vst [vmem:[%s489] sm:$0x3] %v561
    %s563 = scalar_lea.vmem [#allocation2], 16
    %v564 = vld [vmem:[%s563] sm:$0x3]
    %565 = vmatprep.subr.mxu0 0.0
    %566 = vmatpush1.msra.mxu0 %v266
    %567 = vmatprep.subr.mxu0 0.0
    %568 = vmatpush1.msra.mxu0 %v265
    %569 = vmatprep.subr.mxu0 0.0
    %570 = vmatpush1.msra.mxu0 %v264
    %571 = vmatprep.subr.mxu0 0.0
    %572 = vmatpush1.msra.mxu0 %v263
    %573 = vmatprep.subr.mxu0 0.0
    %574 = vmatpush1.msra.mxu0 %v262
    %575 = vmatprep.subr.mxu0 0.0
    %576 = vmatpush1.msra.mxu0 %v261
    %577 = vmatprep.subr.mxu0 0.0
    %578 = vmatpush1.msra.mxu0 %v260
    %579 = vmatprep.subr.mxu0 0.0
    %580 = vmatpush1.msra.mxu0 %v259
    %581 = vmatprep.subr.mxu0 0.0
    %582 = vmatpush1.msra.mxu0 %v258
    %583 = vmatprep.subr.mxu0 0.0
    %584 = vmatpush1.msra.mxu0 %v257
    %585 = vmatprep.subr.mxu0 0.0
    %586 = vmatpush1.msra.mxu0 %v256
    %587 = vmatprep.subr.mxu0 0.0
    %588 = vmatpush1.msra.mxu0 %v255
    %589 = vmatprep.subr.mxu0 0.0
    %590 = vmatpush1.msra.mxu0 %v254
    %591 = vmatprep.subr.mxu0 0.0
    %592 = vmatpush1.msra.mxu0 %v253
    %593 = vmatprep.subr.mxu0 0.0
    %594 = vmatpush1.msra.mxu0 %v252
    %595 = vmatprep.subr.mxu0 0.0
    %596 = vmatpush1.msra.mxu0 %v251
    %597 = vmatprep.subr.mxu0 0.0
    %598 = vmatpush2.msra.mxu0 0.0
    %599 = vmatprep.subr.mxu0 0.0
    %600 = vmatpush2.msra.mxu0 0.0
    %601 = vmatprep.subr.mxu0 0.0
    %602 = vmatpush2.msra.mxu0 0.0
    %603 = vmatprep.subr.mxu0 0.0
    %604 = vmatpush2.msra.mxu0 0.0
    %605 = vmatprep.subr.mxu0 0.0
    %606 = vmatpush2.msra.mxu0 0.0
    %607 = vmatprep.subr.mxu0 0.0
    %608 = vmatpush2.msra.mxu0 0.0
    %609 = vmatprep.subr.mxu0 0.0
    %610 = vmatpush2.msra.mxu0 0.0
    %611 = vmatprep.subr.mxu0 0.0
    %612 = vmatpush2.msra.mxu0 0.0
    %613 = vmatprep.subr.mxu0 0.0
    %614 = vmatpush2.msra.mxu0 0.0
    %615 = vmatprep.subr.mxu0 0.0
    %616 = vmatpush2.msra.mxu0 0.0
    %617 = vmatprep.subr.mxu0 0.0
    %618 = vmatpush2.msra.mxu0 0.0
    %619 = vmatprep.subr.mxu0 0.0
    %620 = vmatpush2.msra.mxu0 0.0
    %621 = vmatprep.subr.mxu0 0.0
    %622 = vmatpush2.msra.mxu0 0.0
    %623 = vmatprep.subr.mxu0 0.0
    %624 = vmatpush2.msra.mxu0 0.0
    %625 = vmatprep.subr.mxu0 0.0
    %626 = vmatpush2.msra.mxu0 0.0
    %627 = vmatprep.subr.mxu0 0.0
    %628 = vmatpush2.msra.mxu0 0.0
    %629 = vmatprep.mubr.f32.mxu0 0.0
    %630 = vmatmul.mubr.f32.gmra.mxu0 %v561
    %v631 = vpop.f32.mrf.mxu0
    %v632 = vadd.f32 0.0, %v631
    %v633 = vpop.f32.mrf.mxu0
    %634 = vdwg.mxu0
    %v635 = vadd.f32 %v564, %v632
    %636 = vst [vmem:[%s563] sm:$0x3] %v635
    %s637 = scalar_lea.vmem [#allocation2], 20
    %v638 = vld [vmem:[%s637] sm:$0x3]
    %639 = vmatprep.subr.mxu0 0.0
    %640 = vmatpush1.msra.mxu0 %v266
    %641 = vmatprep.subr.mxu0 0.0
    %642 = vmatpush1.msra.mxu0 %v265
    %643 = vmatprep.subr.mxu0 0.0
    %644 = vmatpush1.msra.mxu0 %v264
    %645 = vmatprep.subr.mxu0 0.0
    %646 = vmatpush1.msra.mxu0 %v263
    %647 = vmatprep.subr.mxu0 0.0
    %648 = vmatpush1.msra.mxu0 %v262
    %649 = vmatprep.subr.mxu0 0.0
    %650 = vmatpush1.msra.mxu0 %v261
    %651 = vmatprep.subr.mxu0 0.0
    %652 = vmatpush1.msra.mxu0 %v260
    %653 = vmatprep.subr.mxu0 0.0
    %654 = vmatpush1.msra.mxu0 %v259
    %655 = vmatprep.subr.mxu0 0.0
    %656 = vmatpush1.msra.mxu0 %v258
    %657 = vmatprep.subr.mxu0 0.0
    %658 = vmatpush1.msra.mxu0 %v257
    %659 = vmatprep.subr.mxu0 0.0
    %660 = vmatpush1.msra.mxu0 %v256
    %661 = vmatprep.subr.mxu0 0.0
    %662 = vmatpush1.msra.mxu0 %v255
    %663 = vmatprep.subr.mxu0 0.0
    %664 = vmatpush1.msra.mxu0 %v254
    %665 = vmatprep.subr.mxu0 0.0
    %666 = vmatpush1.msra.mxu0 %v253
    %667 = vmatprep.subr.mxu0 0.0
    %668 = vmatpush1.msra.mxu0 %v252
    %669 = vmatprep.subr.mxu0 0.0
    %670 = vmatpush1.msra.mxu0 %v251
    %671 = vmatprep.subr.mxu0 0.0
    %672 = vmatpush2.msra.mxu0 0.0
    %673 = vmatprep.subr.mxu0 0.0
    %674 = vmatpush2.msra.mxu0 0.0
    %675 = vmatprep.subr.mxu0 0.0
    %676 = vmatpush2.msra.mxu0 0.0
    %677 = vmatprep.subr.mxu0 0.0
    %678 = vmatpush2.msra.mxu0 0.0
    %679 = vmatprep.subr.mxu0 0.0
    %680 = vmatpush2.msra.mxu0 0.0
    %681 = vmatprep.subr.mxu0 0.0
    %682 = vmatpush2.msra.mxu0 0.0
    %683 = vmatprep.subr.mxu0 0.0
    %684 = vmatpush2.msra.mxu0 0.0
    %685 = vmatprep.subr.mxu0 0.0
    %686 = vmatpush2.msra.mxu0 0.0
    %687 = vmatprep.subr.mxu0 0.0
    %688 = vmatpush2.msra.mxu0 0.0
    %689 = vmatprep.subr.mxu0 0.0
    %690 = vmatpush2.msra.mxu0 0.0
    %691 = vmatprep.subr.mxu0 0.0
    %692 = vmatpush2.msra.mxu0 0.0
    %693 = vmatprep.subr.mxu0 0.0
    %694 = vmatpush2.msra.mxu0 0.0
    %695 = vmatprep.subr.mxu0 0.0
    %696 = vmatpush2.msra.mxu0 0.0
    %697 = vmatprep.subr.mxu0 0.0
    %698 = vmatpush2.msra.mxu0 0.0
    %699 = vmatprep.subr.mxu0 0.0
    %700 = vmatpush2.msra.mxu0 0.0
    %701 = vmatprep.subr.mxu0 0.0
    %702 = vmatpush2.msra.mxu0 0.0
    %703 = vmatprep.mubr.f32.mxu0 0.0
    %704 = vmatmul.mubr.f32.gmra.mxu0 %v635
    %v705 = vpop.f32.mrf.mxu0
    %v706 = vadd.f32 0.0, %v705
    %v707 = vpop.f32.mrf.mxu0
    %708 = vdwg.mxu0
    %v709 = vadd.f32 %v638, %v706
    %710 = vst [vmem:[%s637] sm:$0x3] %v709
    %s711 = scalar_lea.vmem [#allocation2], 24
    %v712 = vld [vmem:[%s711] sm:$0x3]
    %713 = vmatprep.subr.mxu0 0.0
    %714 = vmatpush1.msra.mxu0 %v266
    %715 = vmatprep.subr.mxu0 0.0
    %716 = vmatpush1.msra.mxu0 %v265
    %717 = vmatprep.subr.mxu0 0.0
    %718 = vmatpush1.msra.mxu0 %v264
    %719 = vmatprep.subr.mxu0 0.0
    %720 = vmatpush1.msra.mxu0 %v263
    %721 = vmatprep.subr.mxu0 0.0
    %722 = vmatpush1.msra.mxu0 %v262
    %723 = vmatprep.subr.mxu0 0.0
    %724 = vmatpush1.msra.mxu0 %v261
    %725 = vmatprep.subr.mxu0 0.0
    %726 = vmatpush1.msra.mxu0 %v260
    %727 = vmatprep.subr.mxu0 0.0
    %728 = vmatpush1.msra.mxu0 %v259
    %729 = vmatprep.subr.mxu0 0.0
    %730 = vmatpush1.msra.mxu0 %v258
    %731 = vmatprep.subr.mxu0 0.0
    %732 = vmatpush1.msra.mxu0 %v257
    %733 = vmatprep.subr.mxu0 0.0
    %734 = vmatpush1.msra.mxu0 %v256
    %735 = vmatprep.subr.mxu0 0.0
    %736 = vmatpush1.msra.mxu0 %v255
    %737 = vmatprep.subr.mxu0 0.0
    %738 = vmatpush1.msra.mxu0 %v254
    %739 = vmatprep.subr.mxu0 0.0
    %740 = vmatpush1.msra.mxu0 %v253
    %741 = vmatprep.subr.mxu0 0.0
    %742 = vmatpush1.msra.mxu0 %v252
    %743 = vmatprep.subr.mxu0 0.0
    %744 = vmatpush1.msra.mxu0 %v251
    %745 = vmatprep.subr.mxu0 0.0
    %746 = vmatpush2.msra.mxu0 0.0
    %747 = vmatprep.subr.mxu0 0.0
    %748 = vmatpush2.msra.mxu0 0.0
    %749 = vmatprep.subr.mxu0 0.0
    %750 = vmatpush2.msra.mxu0 0.0
    %751 = vmatprep.subr.mxu0 0.0
    %752 = vmatpush2.msra.mxu0 0.0
    %753 = vmatprep.subr.mxu0 0.0
    %754 = vmatpush2.msra.mxu0 0.0
    %755 = vmatprep.subr.mxu0 0.0
    %756 = vmatpush2.msra.mxu0 0.0
    %757 = vmatprep.subr.mxu0 0.0
    %758 = vmatpush2.msra.mxu0 0.0
    %759 = vmatprep.subr.mxu0 0.0
    %760 = vmatpush2.msra.mxu0 0.0
    %761 = vmatprep.subr.mxu0 0.0
    %762 = vmatpush2.msra.mxu0 0.0
    %763 = vmatprep.subr.mxu0 0.0
    %764 = vmatpush2.msra.mxu0 0.0
    %765 = vmatprep.subr.mxu0 0.0
    %766 = vmatpush2.msra.mxu0 0.0
    %767 = vmatprep.subr.mxu0 0.0
    %768 = vmatpush2.msra.mxu0 0.0
    %769 = vmatprep.subr.mxu0 0.0
    %770 = vmatpush2.msra.mxu0 0.0
    %771 = vmatprep.subr.mxu0 0.0
    %772 = vmatpush2.msra.mxu0 0.0
    %773 = vmatprep.subr.mxu0 0.0
    %774 = vmatpush2.msra.mxu0 0.0
    %775 = vmatprep.subr.mxu0 0.0
    %776 = vmatpush2.msra.mxu0 0.0
    %777 = vmatprep.mubr.f32.mxu0 0.0
    %778 = vmatmul.mubr.f32.gmra.mxu0 %v709
    %v779 = vpop.f32.mrf.mxu0
    %v780 = vadd.f32 0.0, %v779
    %v781 = vpop.f32.mrf.mxu0
    %782 = vdwg.mxu0
    %v783 = vadd.f32 %v712, %v780
    %784 = vst [vmem:[%s711] sm:$0x3] %v783
    %s785 = scalar_lea.vmem [#allocation2], 28
    %v786 = vld [vmem:[%s785] sm:$0x3]
    %787 = vmatprep.subr.mxu0 0.0
    %788 = vmatpush1.msra.mxu0 %v266
    %789 = vmatprep.subr.mxu0 0.0
    %790 = vmatpush1.msra.mxu0 %v265
    %791 = vmatprep.subr.mxu0 0.0
    %792 = vmatpush1.msra.mxu0 %v264
    %793 = vmatprep.subr.mxu0 0.0
    %794 = vmatpush1.msra.mxu0 %v263
    %795 = vmatprep.subr.mxu0 0.0
    %796 = vmatpush1.msra.mxu0 %v262
    %797 = vmatprep.subr.mxu0 0.0
    %798 = vmatpush1.msra.mxu0 %v261
    %799 = vmatprep.subr.mxu0 0.0
    %800 = vmatpush1.msra.mxu0 %v260
    %801 = vmatprep.subr.mxu0 0.0
    %802 = vmatpush1.msra.mxu0 %v259
    %803 = vmatprep.subr.mxu0 0.0
    %804 = vmatpush1.msra.mxu0 %v258
    %805 = vmatprep.subr.mxu0 0.0
    %806 = vmatpush1.msra.mxu0 %v257
    %807 = vmatprep.subr.mxu0 0.0
    %808 = vmatpush1.msra.mxu0 %v256
    %809 = vmatprep.subr.mxu0 0.0
    %810 = vmatpush1.msra.mxu0 %v255
    %811 = vmatprep.subr.mxu0 0.0
    %812 = vmatpush1.msra.mxu0 %v254
    %813 = vmatprep.subr.mxu0 0.0
    %814 = vmatpush1.msra.mxu0 %v253
    %815 = vmatprep.subr.mxu0 0.0
    %816 = vmatpush1.msra.mxu0 %v252
    %817 = vmatprep.subr.mxu0 0.0
    %818 = vmatpush1.msra.mxu0 %v251
    %819 = vmatprep.subr.mxu0 0.0
    %820 = vmatpush2.msra.mxu0 0.0
    %821 = vmatprep.subr.mxu0 0.0
    %822 = vmatpush2.msra.mxu0 0.0
    %823 = vmatprep.subr.mxu0 0.0
    %824 = vmatpush2.msra.mxu0 0.0
    %825 = vmatprep.subr.mxu0 0.0
    %826 = vmatpush2.msra.mxu0 0.0
    %827 = vmatprep.subr.mxu0 0.0
    %828 = vmatpush2.msra.mxu0 0.0
    %829 = vmatprep.subr.mxu0 0.0
    %830 = vmatpush2.msra.mxu0 0.0
    %831 = vmatprep.subr.mxu0 0.0
    %832 = vmatpush2.msra.mxu0 0.0
    %833 = vmatprep.subr.mxu0 0.0
    %834 = vmatpush2.msra.mxu0 0.0
    %835 = vmatprep.subr.mxu0 0.0
    %836 = vmatpush2.msra.mxu0 0.0
    %837 = vmatprep.subr.mxu0 0.0
    %838 = vmatpush2.msra.mxu0 0.0
    %839 = vmatprep.subr.mxu0 0.0
    %840 = vmatpush2.msra.mxu0 0.0
    %841 = vmatprep.subr.mxu0 0.0
    %842 = vmatpush2.msra.mxu0 0.0
    %843 = vmatprep.subr.mxu0 0.0
    %844 = vmatpush2.msra.mxu0 0.0
    %845 = vmatprep.subr.mxu0 0.0
    %846 = vmatpush2.msra.mxu0 0.0
    %847 = vmatprep.subr.mxu0 0.0
    %848 = vmatpush2.msra.mxu0 0.0
    %849 = vmatprep.subr.mxu0 0.0
    %850 = vmatpush2.msra.mxu0 0.0
    %851 = vmatprep.mubr.f32.mxu0 0.0
    %852 = vmatmul.mubr.f32.gmra.mxu0 %v783
    %v853 = vpop.f32.mrf.mxu0
    %v854 = vadd.f32 0.0, %v853
    %v855 = vpop.f32.mrf.mxu0
    %856 = vdwg.mxu0
    %v857 = vadd.f32 %v786, %v854
    %858 = vst [vmem:[%s785] sm:$0x3] %v857
    %859 = vst [vmem:[#allocation3] sm:$0x3] %v857
    %v860 = vld [vmem:[#allocation2] sm:$0x3]
    %v861 = vld [vmem:[#allocation2 + $0x4] sm:$0x3]
    %v862 = vld [vmem:[#allocation2 + $0x8] sm:$0x3]
    %v863 = vld [vmem:[#allocation2 + $0xc] sm:$0x3]
    %v864 = vld [vmem:[#allocation2 + $0x10] sm:$0x3]
    %v865 = vld [vmem:[#allocation2 + $0x14] sm:$0x3]
    %v866 = vld [vmem:[#allocation2 + $0x18] sm:$0x3]
    %v867 = vld [vmem:[#allocation2 + $0x1c] sm:$0x3]
    %v868 = vld [vmem:[#allocation2 + $0x2] sm:$0x3]
    %v869 = vld [vmem:[#allocation2 + $0x6] sm:$0x3]
    %v870 = vld [vmem:[#allocation2 + $0xa] sm:$0x3]
    %v871 = vld [vmem:[#allocation2 + $0xe] sm:$0x3]
    %v872 = vld [vmem:[#allocation2 + $0x12] sm:$0x3]
    %v873 = vld [vmem:[#allocation2 + $0x16] sm:$0x3]
    %v874 = vld [vmem:[#allocation2 + $0x1a] sm:$0x3]
    %v875 = vld [vmem:[#allocation2 + $0x1e] sm:$0x3]
    %v876 = vadd.f32 %v860, %v868
    %v877 = vadd.f32 %v861, %v869
    %v878 = vadd.f32 %v862, %v870
    %v879 = vadd.f32 %v863, %v871
    %v880 = vadd.f32 %v864, %v872
    %v881 = vadd.f32 %v865, %v873
    %v882 = vadd.f32 %v866, %v874
    %v883 = vadd.f32 %v867, %v875
    %vm884 = vcmask 1041408
    %v885 = vsel %vm884, %v876, 0.0
    %886 = vadd.xlane.f32.xlu0 %v885
    %v887 = vpop.xlane.xlu0 %886
    %v888 = vsel %vm884, %v877, 0.0
    %889 = vadd.xlane.f32.xlu0 %v888
    %v890 = vpop.xlane.xlu0 %889
    %v891 = vsel %vm884, %v878, 0.0
    %892 = vadd.xlane.f32.xlu0 %v891
    %v893 = vpop.xlane.xlu0 %892
    %v894 = vsel %vm884, %v879, 0.0
    %895 = vadd.xlane.f32.xlu0 %v894
    %v896 = vpop.xlane.xlu0 %895
    %v897 = vsel %vm884, %v880, 0.0
    %898 = vadd.xlane.f32.xlu0 %v897
    %v899 = vpop.xlane.xlu0 %898
    %v900 = vsel %vm884, %v881, 0.0
    %901 = vadd.xlane.f32.xlu0 %v900
    %v902 = vpop.xlane.xlu0 %901
    %v903 = vsel %vm884, %v882, 0.0
    %904 = vadd.xlane.f32.xlu0 %v903
    %v905 = vpop.xlane.xlu0 %904
    %v906 = vsel %vm884, %v883, 0.0
    %907 = vadd.xlane.f32.xlu0 %v906
    %v908 = vpop.xlane.xlu0 %907
    %v909 = vmul.f32 %v887, 0.03125
    %v910 = vmul.f32 %v890, 0.03125
    %v911 = vmul.f32 %v893, 0.03125
    %v912 = vmul.f32 %v896, 0.03125
    %v913 = vmul.f32 %v899, 0.03125
    %v914 = vmul.f32 %v902, 0.03125
    %v915 = vmul.f32 %v905, 0.03125
    %v916 = vmul.f32 %v908, 0.03125
    %v917 = vsub.f32 %v876, %v909
    %v918 = vsub.f32 %v877, %v910
    %v919 = vsub.f32 %v878, %v911
    %v920 = vsub.f32 %v879, %v912
    %v921 = vsub.f32 %v880, %v913
    %v922 = vsub.f32 %v881, %v914
    %v923 = vsub.f32 %v882, %v915
    %v924 = vsub.f32 %v883, %v916
    %v925 = vlaneseq
    %v926 = vand.u32 %v925, 127
    %vm927 = vcmp.lt.s32.totalorder %v926, 32
    %v928 = vsel %vm927, %v917, 0.0
    %v929 = vsel %vm927, %v918, 0.0
    %v930 = vsel %vm927, %v919, 0.0
    %v931 = vsel %vm927, %v920, 0.0
    %v932 = vsel %vm927, %v921, 0.0
    %v933 = vsel %vm927, %v922, 0.0
    %v934 = vsel %vm927, %v923, 0.0
    %v935 = vsel %vm927, %v924, 0.0
    %v936 = vmul.f32 %v928, %v928
    %v937 = vmul.f32 %v929, %v929
    %v938 = vmul.f32 %v930, %v930
    %v939 = vmul.f32 %v931, %v931
    %v940 = vmul.f32 %v932, %v932
    %v941 = vmul.f32 %v933, %v933
    %v942 = vmul.f32 %v934, %v934
    %v943 = vmul.f32 %v935, %v935
    %v944 = vsel %vm884, %v936, 0.0
    %945 = vadd.xlane.f32.xlu0 %v944
    %v946 = vpop.xlane.xlu0 %945
    %v947 = vsel %vm884, %v937, 0.0
    %948 = vadd.xlane.f32.xlu0 %v947
    %v949 = vpop.xlane.xlu0 %948
    %v950 = vsel %vm884, %v938, 0.0
    %951 = vadd.xlane.f32.xlu0 %v950
    %v952 = vpop.xlane.xlu0 %951
    %v953 = vsel %vm884, %v939, 0.0
    %954 = vadd.xlane.f32.xlu0 %v953
    %v955 = vpop.xlane.xlu0 %954
    %v956 = vsel %vm884, %v940, 0.0
    %957 = vadd.xlane.f32.xlu0 %v956
    %v958 = vpop.xlane.xlu0 %957
    %v959 = vsel %vm884, %v941, 0.0
    %960 = vadd.xlane.f32.xlu0 %v959
    %v961 = vpop.xlane.xlu0 %960
    %v962 = vsel %vm884, %v942, 0.0
    %963 = vadd.xlane.f32.xlu0 %v962
    %v964 = vpop.xlane.xlu0 %963
    %v965 = vsel %vm884, %v943, 0.0
    %966 = vadd.xlane.f32.xlu0 %v965
    %v967 = vpop.xlane.xlu0 %966
    %v968 = vmul.f32 %v946, 0.03125
    %v969 = vmul.f32 %v949, 0.03125
    %v970 = vmul.f32 %v952, 0.03125
    %v971 = vmul.f32 %v955, 0.03125
    %v972 = vmul.f32 %v958, 0.03125
    %v973 = vmul.f32 %v961, 0.03125
    %v974 = vmul.f32 %v964, 0.03125
    %v975 = vmul.f32 %v967, 0.03125
    %v976 = vadd.f32 %v968, 1e-05
    %v977 = vadd.f32 %v969, 1e-05
    %v978 = vadd.f32 %v970, 1e-05
    %v979 = vadd.f32 %v971, 1e-05
    %v980 = vadd.f32 %v972, 1e-05
    %v981 = vadd.f32 %v973, 1e-05
    %v982 = vadd.f32 %v974, 1e-05
    %v983 = vadd.f32 %v975, 1e-05
    %v984 = vrsqrt.pop %v976
    %v985 = vrsqrt.pop %v977
    %v986 = vrsqrt.pop %v978
    %v987 = vrsqrt.pop %v979
    %v988 = vrsqrt.pop %v980
    %v989 = vrsqrt.pop %v981
    %v990 = vrsqrt.pop %v982
    %v991 = vrsqrt.pop %v983
    %v992 = vmul.f32 %v928, %v984
    %v993 = vmul.f32 %v929, %v985
    %v994 = vmul.f32 %v930, %v986
    %v995 = vmul.f32 %v931, %v987
    %v996 = vmul.f32 %v932, %v988
    %v997 = vmul.f32 %v933, %v989
    %v998 = vmul.f32 %v934, %v990
    %v999 = vmul.f32 %v935, %v991
    %v1000 = vld [vmem:[%s4] sm:$0x1]
    %v1002 = vlaneseq
    %v1003 = vshrl.u32 %v1002, 7
    %v1004 = vsub.s32 0, %v1003
    %v1005 = vrot.slane %v1000, %v1004
    %v1007 = vmul.f32 %v992, %v1005
    %v1008 = vmul.f32 %v993, %v1005
    %v1009 = vmul.f32 %v994, %v1005
    %v1010 = vmul.f32 %v995, %v1005
    %v1011 = vmul.f32 %v996, %v1005
    %v1012 = vmul.f32 %v997, %v1005
    %v1013 = vmul.f32 %v998, %v1005
    %v1014 = vmul.f32 %v999, %v1005
    %v1015 = vld [vmem:[%s5] sm:$0x1]
    %v1017 = vlaneseq
    %v1018 = vshrl.u32 %v1017, 7
    %v1019 = vsub.s32 0, %v1018
    %v1020 = vrot.slane %v1015, %v1019
    %v1022 = vadd.f32 %v1007, %v1020
    %v1023 = vadd.f32 %v1008, %v1020
    %v1024 = vadd.f32 %v1009, %v1020
    %v1025 = vadd.f32 %v1010, %v1020
    %v1026 = vadd.f32 %v1011, %v1020
    %v1027 = vadd.f32 %v1012, %v1020
    %v1028 = vadd.f32 %v1013, %v1020
    %v1029 = vadd.f32 %v1014, %v1020
    %1030 = vst [vmem:[#allocation7] sm:$0x3] %v1022
    %1031 = vst [vmem:[#allocation7 + $0x2] sm:$0x3] %v1023
    %1032 = vst [vmem:[#allocation7 + $0x4] sm:$0x3] %v1024
    %1033 = vst [vmem:[#allocation7 + $0x6] sm:$0x3] %v1025
    %1034 = vst [vmem:[#allocation7 + $0x8] sm:$0x3] %v1026
    %1035 = vst [vmem:[#allocation7 + $0xa] sm:$0x3] %v1027
    %1036 = vst [vmem:[#allocation7 + $0xc] sm:$0x3] %v1028
    %1037 = vst [vmem:[#allocation7 + $0xe] sm:$0x3] %v1029
    // Predicated region
    $region34: #{tpu_custom_call.1} parent=1 // pred_check
      _
    $region35: #{tpu_custom_call.1} parent=1 // pred_check_branch
      %1039 = sbr.rel (0) target = $region37
    $region36: #{tpu_custom_call.1} parent=1 // pred_region
      %s1041 = ssub.s32 256, 256
      %1042 = vsyncadd [#allocation6], %s1041
      %s1043 = sshll.u32 [#allocation7], 4
      %s1044 = int_to_ptr.vmem [resolvable:$true] %s1043
      %1049 = dma.vmem_to_hbm [thread:$0]  %s1044, 256, %s6, [#allocation6], 32, 32, 2
    $region37: #{tpu_custom_call.1} parent=1 // pred_fallthru
      _
    // Predicated region
    $region38: #{tpu_custom_call.1} parent=1 // pred_check
      _
    $region39: #{tpu_custom_call.1} parent=1 // pred_check_branch
      %1051 = sbr.rel (0) target = $region41
    $region40: #{tpu_custom_call.1} parent=1 // pred_region
      %1052 = dma.done [#allocation6], 256
    $region41: #{tpu_custom_call.1} parent=1 // pred_fallthru
      _
    %1053 = vsyncpa [#allocation5], 1
    %1054 = vsyncpa [#allocation6], 1

</llo_original>
